<compile_context>
chip_gen: v7x
topology: tpu7x:2x2x1
jax: 0.10.0
libtpu: 0.0.40
codegen_flags: <defaults>
</compile_context>

<pallas_src>
import jax
import jax.numpy as jnp
from jax.experimental import pallas as pl
from jax.experimental.pallas import tpu as pltpu

# ------------------- constructor hyper-parameters (static) -------------------
N_UNIT = 8          # n_unit  (control units)
N_TREATED = 4       # n_treated
N_TOTAL = N_UNIT + N_TREATED
REG_B = 0.1
LAM_EXPRESS = 1.0
LAM_RECON = 0.5
LAM_PROGNOSTIC = 0.3
TAU = 1.0


def _make_kernel(Bsz, D, H, DY):
    """Build the fused SyncTwin forward kernel for static shapes."""
    NU = N_UNIT
    # parameter-pack row offsets:
    #   [W_enc; b_enc] | blockdiag(W_dec, [C0|y_control]) | b_dec | per-batch rows
    r_enc = 0
    r_rhs = r_enc + D + 1
    r_bdec = r_rhs + H + NU
    r_bp = r_bdec + 1
    # per-batch row column offsets: [logits | y_batch | y_mask]
    c_lg, c_yb, c_ym = 0, NU, NU + DY

    w_err = LAM_EXPRESS / (Bsz * H)
    w_reg = LAM_EXPRESS * REG_B / (Bsz * NU)
    w_l1 = 1.0 / (Bsz * DY)
    W_out = max(H, 2)

    def kernel(xm_ref, pp_ref, out_ref):
        f32 = jnp.float32
        xm = xm_ref[...]                     # (B, T, 2D)  [x | mask] lane-packed
        x = xm[:, :, 0:D]
        mask = xm[:, :, D:2 * D]

        # ---- single fused reduction over time: [mask*x | mask | mask*x^2] ----
        mx = mask * x
        stacked = jnp.concatenate([mx, mask, mx * x], axis=-1)   # (B, T, 3D)
        sums = jnp.sum(stacked, axis=1)                          # (B, 3D)
        num = sums[:, 0:D]          # sum_t mask*x
        den = sums[:, D:2 * D]      # sum_t mask
        sxx = sums[:, 2 * D:3 * D]  # sum_t mask*x^2

        # ---- encoder: masked time-mean -> linear -> tanh -> C (B, H) ----
        xbar = jnp.where(den > 0, num / jnp.maximum(den, 1.0), 0.0)
        w_enc = pp_ref[r_enc:r_enc + D, 0:H]
        b_enc = pp_ref[r_enc + D:r_enc + D + 1, 0:H]
        C = jnp.tanh(jnp.dot(xbar, w_enc, preferred_element_type=f32) + b_enc)

        # ---- gumbel-softmax on precomputed logits (gather/noise/tau in wrapper) ----
        logits = pp_ref[r_bp:r_bp + Bsz, c_lg:c_lg + NU]          # (B, NU)
        m = jnp.max(logits, axis=1, keepdims=True)
        e = jnp.exp(logits - m)
        b_red = e * pl.reciprocal(jnp.sum(e, axis=1, keepdims=True), approx=True)

        # ---- one block-diagonal matmul:  [C | b_red] @ blockdiag(W_dec, [C0|y_ctl])
        #      result lanes: [xhat(no bias) (D) | B_red@C0 (H) | y_hat (DY)] ----
        lhs = jnp.concatenate([C, b_red], axis=1)                 # (B, H+NU)
        rhs = pp_ref[r_rhs:r_rhs + H + NU, 0:D + H + DY]          # (H+NU, D+H+DY)
        proj = jnp.dot(lhs, rhs, preferred_element_type=f32)      # (B, D+H+DY)

        b_dec = pp_ref[r_bdec:r_bdec + 1, 0:D]
        xhat = proj[:, 0:D] + b_dec                               # (B, D) decoder slice
        err = C - proj[:, D:D + H]
        y_hat = proj[:, D + H:D + H + DY]
        y_batch = pp_ref[r_bp:r_bp + Bsz, c_yb:c_yb + DY]
        ymask = pp_ref[r_bp:r_bp + Bsz, c_ym:c_ym + 1]
        diff = y_batch - y_hat

        # ---- batched reductions: per-row partial sums, one cross-sublane reduce ----
        def row(v):
            return jnp.sum(v, axis=1, keepdims=True)

        cols = jnp.concatenate([
            w_err * row(err * err),                                        # 0 expressive err
            w_reg * row(b_red * b_red),                                    # 1 expressive reg
            LAM_RECON * row(sxx - 2.0 * xhat * num + xhat * xhat * den),   # 2 recon numerator
            row(den),                                                      # 3 sum(mask)
            LAM_PROGNOSTIC * row(diff * diff) * ymask,                     # 4 prognostic numerator
            ymask,                                                         # 5 sum(y_mask)
            w_l1 * row(jnp.abs(diff)),                                     # 6 l1
        ], axis=1)                                                         # (B, 7)
        tot = jnp.sum(cols, axis=0, keepdims=True)                         # (1, 7)

        total = (tot[:, 0:1] + tot[:, 1:2]
                 + tot[:, 2:3] / tot[:, 3:4]
                 + tot[:, 4:5] / tot[:, 5:6])
        scal = jnp.concatenate([total, tot[:, 6:7]], axis=1)               # (1, 2)

        # ---- single merged output slab: rows [0,B) = C, row B = [total, l1, 0...] ----
        if W_out > 2:
            scal = jnp.concatenate([scal, jnp.zeros((1, W_out - 2), f32)], axis=1)
        Cw = C if W_out == H else jnp.concatenate(
            [C, jnp.zeros((Bsz, W_out - H), f32)], axis=1)
        out_ref[...] = jnp.concatenate([Cw, scal], axis=0)

    return kernel


def _vmem_spec():
    return pl.BlockSpec(memory_space=pltpu.MemorySpace.VMEM)


def synctwin_forward(params, x, t, mask, batch_ind, y_batch, y_control, y_mask, gumbel):
    """Returns (total_loss, l1_loss, C) — matches SyncTwin.forward semantics."""
    del t  # TODO(synk): the original mclatte encoder/decoder (GRU/LSTM, injected at
    #                    construction) consume t; the deterministic linear
    #                    encoder/decoder used here do not.
    f32 = jnp.float32
    Bsz, _, D = x.shape
    H = params["W_enc"].shape[1]
    DY = y_batch.shape[1]
    NU = N_UNIT

    # ---- input slab 1: [x | mask] lane-packed (one DMA) ----
    xm = jnp.concatenate([x.astype(f32), mask.astype(f32)], axis=-1)   # (B, T, 2D)

    # ---- gumbel-softmax logits computed in the wrapper (fuses into pp concat) ----
    logits = (params["B"][batch_ind, :].astype(f32) + gumbel.astype(f32)) * (1.0 / TAU)

    # ---- input slab 2: parameter + per-batch pack (one DMA) ----
    width = max(H, D + H + DY, D, NU + DY + 1)

    def padw(a):
        a = a.astype(f32)
        return jnp.pad(a, ((0, 0), (0, width - a.shape[1])))

    rhs_top = jnp.concatenate(                                           # (H, D+H+DY)
        [params["W_dec"].astype(f32), jnp.zeros((H, H + DY), f32)], axis=1)
    rhs_bot = jnp.concatenate(                                           # (NU, D+H+DY)
        [jnp.zeros((NU, D), f32), params["C0"].astype(f32), y_control.astype(f32)], axis=1)
    bp = jnp.concatenate(                                                # (B, NU+DY+1)
        [logits, y_batch.astype(f32), y_mask.reshape(-1, 1).astype(f32)], axis=1)

    pp = jnp.concatenate([
        padw(jnp.concatenate([params["W_enc"], params["b_enc"]], axis=0)),  # rows [0, D+1)
        padw(jnp.concatenate([rhs_top, rhs_bot], axis=0)),                  # H+NU rows
        padw(params["b_dec"]),                                              # 1 row
        padw(bp),                                                           # Bsz rows
    ], axis=0)

    W_out = max(H, 2)
    out = pl.pallas_call(
        _make_kernel(Bsz, D, H, DY),
        out_shape=jax.ShapeDtypeStruct((Bsz + 1, W_out), f32),
        in_specs=[_vmem_spec(), _vmem_spec()],
        out_specs=_vmem_spec(),
    )(xm, pp)

    C = out[0:Bsz, 0:H]
    return out[Bsz, 0], out[Bsz, 1], C


def synctwin_reference(params, x, t, mask, batch_ind, y_batch, y_control, y_mask, gumbel):
    """Pure-JAX reference with identical semantics (correctness anchor)."""
    del t
    num = jnp.sum(x * mask, axis=1)
    den = jnp.sum(mask, axis=1)
    xbar = jnp.where(den > 0, num / jnp.maximum(den, 1.0), 0.0)
    C = jnp.tanh(xbar @ params["W_enc"] + params["b_enc"])
    x_hat = jnp.broadcast_to((C @ params["W_dec"] + params["b_dec"])[:, None, :], x.shape)
    logits = (params["B"][batch_ind, :] + gumbel) / TAU
    B_reduced = jax.nn.softmax(logits, axis=1)
    err = C - B_reduced @ params["C0"]
    self_expr = LAM_EXPRESS * (jnp.mean(err ** 2) + REG_B * jnp.mean(B_reduced ** 2))
    r = (x - x_hat) * mask
    recon = jnp.sum(r ** 2) / jnp.sum(mask) * LAM_RECON
    y_hat = B_reduced @ y_control
    prog = jnp.sum(((y_batch - y_hat) ** 2) * y_mask[:, None]) / jnp.sum(y_mask) * LAM_PROGNOSTIC
    l1 = jnp.mean(jnp.abs(y_hat - y_batch))
    return self_expr + recon + prog, l1, C


def init_params(key, D, H):
    n_total = N_UNIT + N_TREATED
    k1, k2, k3, k4 = jax.random.split(key, 4)
    return {
        "B": jnp.ones((n_total, N_UNIT), jnp.float32) * 1e-4,   # nn.Parameter init
        "C0": jnp.zeros((N_UNIT, H), jnp.float32),               # buffer (zeros)
        "W_enc": 0.1 * jax.random.normal(k1, (D, H), jnp.float32),
        "b_enc": 0.1 * jax.random.normal(k2, (1, H), jnp.float32),
        "W_dec": 0.1 * jax.random.normal(k3, (H, D), jnp.float32),
        "b_dec": 0.1 * jax.random.normal(k4, (1, D), jnp.float32),
    }


if __name__ == "__main__":
    key = jax.random.PRNGKey(0)
    kx, km, ky1, ky2, kg, kp = jax.random.split(key, 6)

    Bsz, T, D, H, DY = 6, 8, 4, 16, 3

    x = jax.random.normal(kx, (Bsz, T, D), jnp.float32)
    t = jnp.broadcast_to(jnp.arange(T, dtype=jnp.float32)[None, :, None], (Bsz, T, 1))
    mask = (jax.random.uniform(km, (Bsz, T, D)) > 0.2).astype(jnp.float32)
    batch_ind = jnp.array([0, 3, 5, 7, 9, 11], dtype=jnp.int32)      # control + treated units
    y_batch = jax.random.normal(ky1, (Bsz, DY), jnp.float32)
    y_control = jax.random.normal(ky2, (N_UNIT, DY), jnp.float32)
    y_mask = (batch_ind < N_UNIT).astype(jnp.float32)                 # 1 if control

    # Gumbel noise for F.gumbel_softmax (sampled deterministically on host).
    u = jax.random.uniform(kg, (Bsz, N_UNIT), jnp.float32, minval=1e-6, maxval=1.0 - 1e-6)
    gumbel = -jnp.log(-jnp.log(u))

    params = init_params(kp, D, H)

    fwd = jax.jit(synctwin_forward)
    total, l1, C = fwd(params, x, t, mask, batch_ind, y_batch, y_control, y_mask, gumbel)
    jax.block_until_ready((total, l1, C))

    total_r, l1_r, C_r = synctwin_reference(params, x, t, mask, batch_ind,
                                            y_batch, y_control, y_mask, gumbel)
    assert jnp.allclose(total, total_r, rtol=5e-3, atol=1e-4), (total, total_r)
    assert jnp.allclose(l1, l1_r, rtol=5e-3, atol=1e-4), (l1, l1_r)
    assert jnp.allclose(C, C_r, rtol=5e-3, atol=1e-4)

    print("KERNEL_OK")
</pallas_src>

<mosaic_0001>
module attributes {stable_mosaic.version = 11 : i64} {
  func.func @kernel(%arg0: memref<6x8x8xf32, #tpu.memory_space<vmem>>, %arg1: memref<36x23xf32, #tpu.memory_space<vmem>>, %arg2: memref<7x16xf32, #tpu.memory_space<vmem>>) attributes {dimension_semantics = [], scalar_prefetch = 0 : i64, scratch_operands = 0 : i64, tpu.core_type = #tpu.core_type<tc>} {
    %c0 = arith.constant 0 : index
    %c0_0 = arith.constant 0 : index
    %c0_1 = arith.constant 0 : index
    %0 = vector.load %arg0[%c0, %c0_0, %c0_1] : memref<6x8x8xf32, #tpu.memory_space<vmem>>, vector<6x8x8xf32>
    %1 = vector.extract_strided_slice %0 {offsets = [0, 0, 0], sizes = [6, 8, 4], strides = [1, 1, 1]} : vector<6x8x8xf32> to vector<6x8x4xf32>
    %2 = vector.extract_strided_slice %0 {offsets = [0, 0, 4], sizes = [6, 8, 4], strides = [1, 1, 1]} : vector<6x8x8xf32> to vector<6x8x4xf32>
    %3 = arith.mulf %2, %1 : vector<6x8x4xf32>
    %4 = arith.mulf %3, %1 : vector<6x8x4xf32>
    %5 = tpu.concatenate %3, %2, %4 in 2 : vector<6x8x4xf32>, vector<6x8x4xf32>, vector<6x8x4xf32> -> vector<6x8x12xf32>
    %cst = arith.constant dense<0.000000e+00> : vector<6x12xf32>
    %6 = vector.multi_reduction <add>, %5, %cst [1] : vector<6x8x12xf32> to vector<6x12xf32>
    %7 = vector.extract_strided_slice %6 {offsets = [0, 0], sizes = [6, 4], strides = [1, 1]} : vector<6x12xf32> to vector<6x4xf32>
    %8 = vector.extract_strided_slice %6 {offsets = [0, 4], sizes = [6, 4], strides = [1, 1]} : vector<6x12xf32> to vector<6x4xf32>
    %9 = vector.extract_strided_slice %6 {offsets = [0, 8], sizes = [6, 4], strides = [1, 1]} : vector<6x12xf32> to vector<6x4xf32>
    %cst_2 = arith.constant 0.000000e+00 : f32
    %10 = vector.broadcast %cst_2 : f32 to vector<6x4xf32>
    %11 = arith.cmpf ogt, %8, %10 : vector<6x4xf32>
    %cst_3 = arith.constant 1.000000e+00 : f32
    %12 = vector.broadcast %cst_3 : f32 to vector<6x4xf32>
    %13 = arith.maximumf %8, %12 : vector<6x4xf32>
    %14 = arith.divf %7, %13 : vector<6x4xf32>
    %cst_4 = arith.constant 0.000000e+00 : f32
    %15 = vector.broadcast %cst_4 : f32 to vector<6x4xf32>
    %16 = arith.select %11, %14, %15 : vector<6x4xi1>, vector<6x4xf32>
    %c0_5 = arith.constant 0 : index
    %c0_6 = arith.constant 0 : index
    %17 = vector.load %arg1[%c0_5, %c0_6] : memref<36x23xf32, #tpu.memory_space<vmem>>, vector<4x16xf32>
    %c4 = arith.constant 4 : index
    %c0_7 = arith.constant 0 : index
    %18 = vector.load %arg1[%c4, %c0_7] : memref<36x23xf32, #tpu.memory_space<vmem>>, vector<1x16xf32>
    %cst_8 = arith.constant dense<0.000000e+00> : vector<6x16xf32>
    %19 = tpu.matmul %16, %17, %cst_8 {dimension_numbers = #tpu.dot_dimension_numbers<[1], [0], [0], [1], [0, 0, 1, 1], [], []>} : vector<6x4xf32>, vector<4x16xf32>, vector<6x16xf32> -> vector<6x16xf32>
    %20 = vector.broadcast %18 : vector<1x16xf32> to vector<6x16xf32>
    %21 = arith.addf %19, %20 : vector<6x16xf32>
    %22 = math.tanh %21 : vector<6x16xf32>
    %c30 = arith.constant 30 : index
    %c0_9 = arith.constant 0 : index
    %23 = vector.load %arg1[%c30, %c0_9] : memref<36x23xf32, #tpu.memory_space<vmem>>, vector<6x8xf32>
    %cst_10 = arith.constant dense<0xFF800000> : vector<6xf32>
    %24 = vector.multi_reduction <maximumf>, %23, %cst_10 [1] : vector<6x8xf32> to vector<6xf32>
    %25 = vector.shape_cast %24 : vector<6xf32> to vector<6x1xf32>
    %26 = vector.broadcast %25 : vector<6x1xf32> to vector<6x8xf32>
    %27 = arith.subf %23, %26 : vector<6x8xf32>
    %28 = math.exp %27 : vector<6x8xf32>
    %cst_11 = arith.constant dense<0.000000e+00> : vector<6xf32>
    %29 = vector.multi_reduction <add>, %28, %cst_11 [1] : vector<6x8xf32> to vector<6xf32>
    %30 = vector.shape_cast %29 : vector<6xf32> to vector<6x1xf32>
    %31 = tpu.reciprocal %30 {approx = true} : vector<6x1xf32> -> vector<6x1xf32>
    %32 = vector.broadcast %31 : vector<6x1xf32> to vector<6x8xf32>
    %33 = arith.mulf %28, %32 : vector<6x8xf32>
    %34 = tpu.concatenate %22, %33 in 1 : vector<6x16xf32>, vector<6x8xf32> -> vector<6x24xf32>
    %c5 = arith.constant 5 : index
    %c0_12 = arith.constant 0 : index
    %35 = vector.load %arg1[%c5, %c0_12] : memref<36x23xf32, #tpu.memory_space<vmem>>, vector<24x23xf32>
    %cst_13 = arith.constant dense<0.000000e+00> : vector<6x23xf32>
    %36 = tpu.matmul %34, %35, %cst_13 {dimension_numbers = #tpu.dot_dimension_numbers<[1], [0], [0], [1], [0, 0, 1, 1], [], []>} : vector<6x24xf32>, vector<24x23xf32>, vector<6x23xf32> -> vector<6x23xf32>
    %c29 = arith.constant 29 : index
    %c0_14 = arith.constant 0 : index
    %37 = vector.load %arg1[%c29, %c0_14] : memref<36x23xf32, #tpu.memory_space<vmem>>, vector<1x4xf32>
    %38 = vector.extract_strided_slice %36 {offsets = [0, 0], sizes = [6, 4], strides = [1, 1]} : vector<6x23xf32> to vector<6x4xf32>
    %39 = vector.broadcast %37 : vector<1x4xf32> to vector<6x4xf32>
    %40 = arith.addf %38, %39 : vector<6x4xf32>
    %41 = vector.extract_strided_slice %36 {offsets = [0, 4], sizes = [6, 16], strides = [1, 1]} : vector<6x23xf32> to vector<6x16xf32>
    %42 = arith.subf %22, %41 : vector<6x16xf32>
    %43 = vector.extract_strided_slice %36 {offsets = [0, 20], sizes = [6, 3], strides = [1, 1]} : vector<6x23xf32> to vector<6x3xf32>
    %c30_15 = arith.constant 30 : index
    %c8 = arith.constant 8 : index
    %44 = vector.load %arg1[%c30_15, %c8] : memref<36x23xf32, #tpu.memory_space<vmem>>, vector<6x3xf32>
    %c30_16 = arith.constant 30 : index
    %c11 = arith.constant 11 : index
    %45 = vector.load %arg1[%c30_16, %c11] : memref<36x23xf32, #tpu.memory_space<vmem>>, vector<6x1xf32>
    %46 = arith.subf %44, %43 : vector<6x3xf32>
    %47 = arith.mulf %42, %42 : vector<6x16xf32>
    %cst_17 = arith.constant dense<0.000000e+00> : vector<6xf32>
    %48 = vector.multi_reduction <add>, %47, %cst_17 [1] : vector<6x16xf32> to vector<6xf32>
    %49 = vector.shape_cast %48 : vector<6xf32> to vector<6x1xf32>
    %cst_18 = arith.constant 0.010416667 : f32
    %50 = vector.broadcast %cst_18 : f32 to vector<6x1xf32>
    %51 = arith.mulf %50, %49 : vector<6x1xf32>
    %52 = arith.mulf %33, %33 : vector<6x8xf32>
    %cst_19 = arith.constant dense<0.000000e+00> : vector<6xf32>
    %53 = vector.multi_reduction <add>, %52, %cst_19 [1] : vector<6x8xf32> to vector<6xf32>
    %54 = vector.shape_cast %53 : vector<6xf32> to vector<6x1xf32>
    %cst_20 = arith.constant 0.00208333344 : f32
    %55 = vector.broadcast %cst_20 : f32 to vector<6x1xf32>
    %56 = arith.mulf %55, %54 : vector<6x1xf32>
    %cst_21 = arith.constant 2.000000e+00 : f32
    %57 = vector.broadcast %cst_21 : f32 to vector<6x4xf32>
    %58 = arith.mulf %57, %40 : vector<6x4xf32>
    %59 = arith.mulf %58, %7 : vector<6x4xf32>
    %60 = arith.subf %9, %59 : vector<6x4xf32>
    %61 = arith.mulf %40, %40 : vector<6x4xf32>
    %62 = arith.mulf %61, %8 : vector<6x4xf32>
    %63 = arith.addf %60, %62 : vector<6x4xf32>
    %cst_22 = arith.constant dense<0.000000e+00> : vector<6xf32>
    %64 = vector.multi_reduction <add>, %63, %cst_22 [1] : vector<6x4xf32> to vector<6xf32>
    %65 = vector.shape_cast %64 : vector<6xf32> to vector<6x1xf32>
    %cst_23 = arith.constant 5.000000e-01 : f32
    %66 = vector.broadcast %cst_23 : f32 to vector<6x1xf32>
    %67 = arith.mulf %66, %65 : vector<6x1xf32>
    %cst_24 = arith.constant dense<0.000000e+00> : vector<6xf32>
    %68 = vector.multi_reduction <add>, %8, %cst_24 [1] : vector<6x4xf32> to vector<6xf32>
    %69 = vector.shape_cast %68 : vector<6xf32> to vector<6x1xf32>
    %70 = arith.mulf %46, %46 : vector<6x3xf32>
    %cst_25 = arith.constant dense<0.000000e+00> : vector<6xf32>
    %71 = vector.multi_reduction <add>, %70, %cst_25 [1] : vector<6x3xf32> to vector<6xf32>
    %72 = vector.shape_cast %71 : vector<6xf32> to vector<6x1xf32>
    %cst_26 = arith.constant 3.000000e-01 : f32
    %73 = vector.broadcast %cst_26 : f32 to vector<6x1xf32>
    %74 = arith.mulf %73, %72 : vector<6x1xf32>
    %75 = arith.mulf %74, %45 : vector<6x1xf32>
    %76 = math.absf %46 : vector<6x3xf32>
    %cst_27 = arith.constant dense<0.000000e+00> : vector<6xf32>
    %77 = vector.multi_reduction <add>, %76, %cst_27 [1] : vector<6x3xf32> to vector<6xf32>
    %78 = vector.shape_cast %77 : vector<6xf32> to vector<6x1xf32>
    %cst_28 = arith.constant 0.055555556 : f32
    %79 = vector.broadcast %cst_28 : f32 to vector<6x1xf32>
    %80 = arith.mulf %79, %78 : vector<6x1xf32>
    %81 = tpu.concatenate %51, %56, %67, %69, %75, %45, %80 in 1 : vector<6x1xf32>, vector<6x1xf32>, vector<6x1xf32>, vector<6x1xf32>, vector<6x1xf32>, vector<6x1xf32>, vector<6x1xf32> -> vector<6x7xf32>
    %cst_29 = arith.constant dense<0.000000e+00> : vector<7xf32>
    %82 = vector.multi_reduction <add>, %81, %cst_29 [0] : vector<6x7xf32> to vector<7xf32>
    %83 = vector.shape_cast %82 : vector<7xf32> to vector<1x7xf32>
    %84 = vector.extract_strided_slice %83 {offsets = [0, 0], sizes = [1, 1], strides = [1, 1]} : vector<1x7xf32> to vector<1x1xf32>
    %85 = vector.extract_strided_slice %83 {offsets = [0, 1], sizes = [1, 1], strides = [1, 1]} : vector<1x7xf32> to vector<1x1xf32>
    %86 = arith.addf %84, %85 : vector<1x1xf32>
    %87 = vector.extract_strided_slice %83 {offsets = [0, 2], sizes = [1, 1], strides = [1, 1]} : vector<1x7xf32> to vector<1x1xf32>
    %88 = vector.extract_strided_slice %83 {offsets = [0, 3], sizes = [1, 1], strides = [1, 1]} : vector<1x7xf32> to vector<1x1xf32>
    %89 = arith.divf %87, %88 : vector<1x1xf32>
    %90 = arith.addf %86, %89 : vector<1x1xf32>
    %91 = vector.extract_strided_slice %83 {offsets = [0, 4], sizes = [1, 1], strides = [1, 1]} : vector<1x7xf32> to vector<1x1xf32>
    %92 = vector.extract_strided_slice %83 {offsets = [0, 5], sizes = [1, 1], strides = [1, 1]} : vector<1x7xf32> to vector<1x1xf32>
    %93 = arith.divf %91, %92 : vector<1x1xf32>
    %94 = arith.addf %90, %93 : vector<1x1xf32>
    %95 = vector.extract_strided_slice %83 {offsets = [0, 6], sizes = [1, 1], strides = [1, 1]} : vector<1x7xf32> to vector<1x1xf32>
    %96 = tpu.concatenate %94, %95 in 1 : vector<1x1xf32>, vector<1x1xf32> -> vector<1x2xf32>
    %cst_30 = arith.constant 0.000000e+00 : f32
    %97 = vector.broadcast %cst_30 : f32 to vector<1x14xf32>
    %98 = tpu.concatenate %96, %97 in 1 : vector<1x2xf32>, vector<1x14xf32> -> vector<1x16xf32>
    %99 = tpu.concatenate %22, %98 in 0 : vector<6x16xf32>, vector<1x16xf32> -> vector<7x16xf32>
    %c0_31 = arith.constant 0 : index
    %c0_32 = arith.constant 0 : index
    %100 = vector.load %arg2[%c0_31, %c0_32] : memref<7x16xf32, #tpu.memory_space<vmem>>, vector<7x16xf32>
    tpu.vector_store %arg2[%c0_31, %c0_32], %99 {strides = array<i32>} : memref<7x16xf32, #tpu.memory_space<vmem>>, vector<7x16xf32>,
    return
  }
}

</mosaic_0001>

<llo_original>
// kernel: synctwin_forward.1
$region0: #{synctwin_forward.1}
  #allocation0 [shape = 'u32[]', space=smem, size = 0x4, offset = 0x4, fixed_abs, tag = 'smem constant byte address 0x4 - core index']
  #allocation1 [shape = 'u32[144,128]{1,0:T(1,128)}', space=vmem, size = 0x12000, scoped, tag = 'internal scratch']
  %s0 = inlined_call_operand.vmem [shape: f32[6,8,8], index: 0, kind: input, shape index: {}]
  %s1 = inlined_call_operand.vmem [shape: f32[36,23], index: 1, kind: input, shape index: {}]
  %s2 = inlined_call_operand.vmem [shape: f32[7,16], index: 2, kind: output, shape index: {}]
  %s3 = sld [smem:[#allocation0]]
  $region18: #{synctwin_forward.1} parent=0
    _
  %s5 = ssub.s32 1, %s3
  %s6 = scalar_select 0, %s5, %s3
  // Predicated region
  $region2: #{synctwin_forward.1} parent=0 // pred_check
    _
  $region3: #{synctwin_forward.1} parent=0 // pred_check_branch
    %8 = sbr.rel (0) target = $region5
  $region4: #{synctwin_forward.1} parent=0 // pred_region
    _
  $region5: #{synctwin_forward.1} parent=0 // pred_fallthru
    _
  // Predicated region
  $region6: #{synctwin_forward.1} parent=0 // pred_check
    _
  $region7: #{synctwin_forward.1} parent=0 // pred_check_branch
    %10 = sbr.rel (0) target = $region9
  $region8: #{synctwin_forward.1} parent=0 // pred_region
    _
  $region9: #{synctwin_forward.1} parent=0 // pred_fallthru
    _
  %v11 = vld [vmem:[%s0] sm:$0xff]
  %v12 = vld [vmem:[%s0 + $0x8] sm:$0xff]
  %v13 = vld [vmem:[%s0 + $0x10] sm:$0xff]
  %v14 = vld [vmem:[%s0 + $0x18] sm:$0xff]
  %v15 = vld [vmem:[%s0 + $0x20] sm:$0xff]
  %v16 = vld [vmem:[%s0 + $0x28] sm:$0xff]
  %23 = vrot.lane.b32.xlu0 %v11, 4
  %v24 = vpop.permute.xlu0 %23
  %25 = vrot.lane.b32.xlu0 %v12, 4
  %v26 = vpop.permute.xlu0 %25
  %27 = vrot.lane.b32.xlu0 %v13, 4
  %v28 = vpop.permute.xlu0 %27
  %29 = vrot.lane.b32.xlu0 %v14, 4
  %v30 = vpop.permute.xlu0 %29
  %31 = vrot.lane.b32.xlu0 %v15, 4
  %v32 = vpop.permute.xlu0 %31
  %33 = vrot.lane.b32.xlu0 %v16, 4
  %v34 = vpop.permute.xlu0 %33
  %v41 = vmul.f32 %v11, %v24
  %v42 = vmul.f32 %v12, %v26
  %v43 = vmul.f32 %v13, %v28
  %v44 = vmul.f32 %v14, %v30
  %v45 = vmul.f32 %v15, %v32
  %v46 = vmul.f32 %v16, %v34
  %v47 = vmul.f32 %v41, %v24
  %v48 = vmul.f32 %v42, %v26
  %v49 = vmul.f32 %v43, %v28
  %v50 = vmul.f32 %v44, %v30
  %v51 = vmul.f32 %v45, %v32
  %v52 = vmul.f32 %v46, %v34
  %59 = vrot.lane.b32.xlu0 %v41, 124
  %v60 = vpop.permute.xlu0 %59
  %61 = vrot.lane.b32.xlu0 %v42, 124
  %v62 = vpop.permute.xlu0 %61
  %63 = vrot.lane.b32.xlu0 %v43, 124
  %v64 = vpop.permute.xlu0 %63
  %65 = vrot.lane.b32.xlu0 %v44, 124
  %v66 = vpop.permute.xlu0 %65
  %67 = vrot.lane.b32.xlu0 %v45, 124
  %v68 = vpop.permute.xlu0 %67
  %69 = vrot.lane.b32.xlu0 %v46, 124
  %v70 = vpop.permute.xlu0 %69
  %83 = vrot.lane.b32.xlu0 %v47, 4
  %v84 = vpop.permute.xlu0 %83
  %85 = vrot.lane.b32.xlu0 %v48, 4
  %v86 = vpop.permute.xlu0 %85
  %87 = vrot.lane.b32.xlu0 %v49, 4
  %v88 = vpop.permute.xlu0 %87
  %89 = vrot.lane.b32.xlu0 %v50, 4
  %v90 = vpop.permute.xlu0 %89
  %91 = vrot.lane.b32.xlu0 %v51, 4
  %v92 = vpop.permute.xlu0 %91
  %93 = vrot.lane.b32.xlu0 %v52, 4
  %v94 = vpop.permute.xlu0 %93
  %vm101 = vcmask 31744
  %v102 = vsel %vm101, %v60, %v11
  %v103 = vsel %vm101, %v62, %v12
  %v104 = vsel %vm101, %v64, %v13
  %v105 = vsel %vm101, %v66, %v14
  %v106 = vsel %vm101, %v68, %v15
  %v107 = vsel %vm101, %v70, %v16
  %vm108 = vcmask 64512
  %v109 = vsel %vm108, %v102, %v84
  %v110 = vsel %vm108, %v103, %v86
  %v111 = vsel %vm108, %v104, %v88
  %v112 = vsel %vm108, %v105, %v90
  %v113 = vsel %vm108, %v106, %v92
  %v114 = vsel %vm108, %v107, %v94
  %vm115 = vcmask 97280
  %v116 = vsel %vm115, %v109, 0.0
  %v117 = vrot.slane %v116, 4
  %v118 = vadd.f32 %v116, %v117
  %v119 = vrot.slane %v118, 2
  %v120 = vadd.f32 %v118, %v119
  %v121 = vrot.slane %v120, 1
  %v122 = vadd.f32 %v120, %v121
  %v123 = vsel %vm115, %v110, 0.0
  %v124 = vrot.slane %v123, 4
  %v125 = vadd.f32 %v123, %v124
  %v126 = vrot.slane %v125, 2
  %v127 = vadd.f32 %v125, %v126
  %v128 = vrot.slane %v127, 1
  %v129 = vadd.f32 %v127, %v128
  %v130 = vsel %vm115, %v111, 0.0
  %v131 = vrot.slane %v130, 4
  %v132 = vadd.f32 %v130, %v131
  %v133 = vrot.slane %v132, 2
  %v134 = vadd.f32 %v132, %v133
  %v135 = vrot.slane %v134, 1
  %v136 = vadd.f32 %v134, %v135
  %v137 = vsel %vm115, %v112, 0.0
  %v138 = vrot.slane %v137, 4
  %v139 = vadd.f32 %v137, %v138
  %v140 = vrot.slane %v139, 2
  %v141 = vadd.f32 %v139, %v140
  %v142 = vrot.slane %v141, 1
  %v143 = vadd.f32 %v141, %v142
  %v144 = vsel %vm115, %v113, 0.0
  %v145 = vrot.slane %v144, 4
  %v146 = vadd.f32 %v144, %v145
  %v147 = vrot.slane %v146, 2
  %v148 = vadd.f32 %v146, %v147
  %v149 = vrot.slane %v148, 1
  %v150 = vadd.f32 %v148, %v149
  %v151 = vsel %vm115, %v114, 0.0
  %v152 = vrot.slane %v151, 4
  %v153 = vadd.f32 %v151, %v152
  %v154 = vrot.slane %v153, 2
  %v155 = vadd.f32 %v153, %v154
  %v156 = vrot.slane %v155, 1
  %v157 = vadd.f32 %v155, %v156
  %vm158 = vcmp.gt.f32.partialorder %v122, 0.0
  %vm159 = vcmp.gt.f32.partialorder %v129, 0.0
  %vm160 = vcmp.gt.f32.partialorder %v136, 0.0
  %vm161 = vcmp.gt.f32.partialorder %v143, 0.0
  %vm162 = vcmp.gt.f32.partialorder %v150, 0.0
  %vm163 = vcmp.gt.f32.partialorder %v157, 0.0
  %v164 = vmax.f32 %v122, 1.0
  %v165 = vmax.f32 %v129, 1.0
  %v166 = vmax.f32 %v136, 1.0
  %v167 = vmax.f32 %v143, 1.0
  %v168 = vmax.f32 %v150, 1.0
  %v169 = vmax.f32 %v157, 1.0
  %176 = vrot.lane.b32.xlu0 %v164, 124
  %v177 = vpop.permute.xlu0 %176
  %178 = vrot.lane.b32.xlu0 %v165, 124
  %v179 = vpop.permute.xlu0 %178
  %180 = vrot.lane.b32.xlu0 %v166, 124
  %v181 = vpop.permute.xlu0 %180
  %182 = vrot.lane.b32.xlu0 %v167, 124
  %v183 = vpop.permute.xlu0 %182
  %184 = vrot.lane.b32.xlu0 %v168, 124
  %v185 = vpop.permute.xlu0 %184
  %186 = vrot.lane.b32.xlu0 %v169, 124
  %v187 = vpop.permute.xlu0 %186
  %v194 = vrcp.pop %v177
  %v195 = vmul.f32 %v122, %v194
  %v196 = vrcp.pop %v179
  %v197 = vmul.f32 %v129, %v196
  %v198 = vrcp.pop %v181
  %v199 = vmul.f32 %v136, %v198
  %v200 = vrcp.pop %v183
  %v201 = vmul.f32 %v143, %v200
  %v202 = vrcp.pop %v185
  %v203 = vmul.f32 %v150, %v202
  %v204 = vrcp.pop %v187
  %v205 = vmul.f32 %v157, %v204
  %212 = vrot.lane.b32.xlu0 %v195, 4
  %v213 = vpop.permute.xlu0 %212
  %214 = vrot.lane.b32.xlu0 %v197, 4
  %v215 = vpop.permute.xlu0 %214
  %216 = vrot.lane.b32.xlu0 %v199, 4
  %v217 = vpop.permute.xlu0 %216
  %218 = vrot.lane.b32.xlu0 %v201, 4
  %v219 = vpop.permute.xlu0 %218
  %220 = vrot.lane.b32.xlu0 %v203, 4
  %v221 = vpop.permute.xlu0 %220
  %222 = vrot.lane.b32.xlu0 %v205, 4
  %v223 = vpop.permute.xlu0 %222
  %v230 = vsel %vm158, %v213, 0.0
  %v231 = vsel %vm159, %v215, 0.0
  %v232 = vsel %vm160, %v217, 0.0
  %v233 = vsel %vm161, %v219, 0.0
  %v234 = vsel %vm162, %v221, 0.0
  %v235 = vsel %vm163, %v223, 0.0
  %v236 = vld [vmem:[%s1] sm:$0xf]
  %v237 = vld [vmem:[%s1 + $0x4] sm:$0x1]
  %v238 = vlaneseq
  %v239 = vshrl.u32 %v238, 7
  %v240 = vsub.s32 0, %v239
  %v241 = vrot.slane %v237, %v240
  %v248 = vrot.slane %v231, 7
  %vm249 = vcmask 1041409
  %v250 = vsel %vm249, %v248, %v230
  %v251 = vrot.slane %v232, 6
  %vm252 = vcmask 1042434
  %v253 = vsel %vm252, %v251, %v250
  %v254 = vrot.slane %v233, 5
  %vm255 = vcmask 1043459
  %v256 = vsel %vm255, %v254, %v253
  %v257 = vrot.slane %v234, 4
  %vm258 = vcmask 1044484
  %v259 = vsel %vm258, %v257, %v256
  %v260 = vrot.slane %v235, 3
  %vm261 = vcmask 1045509
  %v262 = vsel %vm261, %v260, %v259
  %263 = vrot.lane.b32.xlu0 %v262, 124
  %v264 = vpop.permute.xlu0 %263
  %v265 = vsel %vm101, %v264, 0
  %vm267 = vcmask 1043456
  %v269 = vsel %vm267, %v236, 0
  %271 = vmatprep.subr.mxu0 0.0
  %272 = vmatpush1.msra.mxu0 %v269
  %273 = vmatprep.subr.mxu0 0.0
  %274 = vmatpush1.msra.mxu0 0.0
  %275 = vmatprep.subr.mxu0 0.0
  %276 = vmatpush1.msra.mxu0 0.0
  %277 = vmatprep.subr.mxu0 0.0
  %278 = vmatpush1.msra.mxu0 0.0
  %279 = vmatprep.subr.mxu0 0.0
  %280 = vmatpush1.msra.mxu0 0.0
  %281 = vmatprep.subr.mxu0 0.0
  %282 = vmatpush1.msra.mxu0 0.0
  %283 = vmatprep.subr.mxu0 0.0
  %284 = vmatpush1.msra.mxu0 0.0
  %285 = vmatprep.subr.mxu0 0.0
  %286 = vmatpush1.msra.mxu0 0.0
  %287 = vmatprep.subr.mxu0 0.0
  %288 = vmatpush1.msra.mxu0 0.0
  %289 = vmatprep.subr.mxu0 0.0
  %290 = vmatpush1.msra.mxu0 0.0
  %291 = vmatprep.subr.mxu0 0.0
  %292 = vmatpush1.msra.mxu0 0.0
  %293 = vmatprep.subr.mxu0 0.0
  %294 = vmatpush1.msra.mxu0 0.0
  %295 = vmatprep.subr.mxu0 0.0
  %296 = vmatpush1.msra.mxu0 0.0
  %297 = vmatprep.subr.mxu0 0.0
  %298 = vmatpush1.msra.mxu0 0.0
  %299 = vmatprep.subr.mxu0 0.0
  %300 = vmatpush1.msra.mxu0 0.0
  %301 = vmatprep.subr.mxu0 0.0
  %302 = vmatpush1.msra.mxu0 0.0
  %303 = vmatprep.subr.mxu0 0.0
  %304 = vmatpush1.msra.mxu0 0.0
  %305 = vmatprep.subr.mxu0 0.0
  %306 = vmatpush1.msra.mxu0 0.0
  %307 = vmatprep.subr.mxu0 0.0
  %308 = vmatpush1.msra.mxu0 0.0
  %309 = vmatprep.subr.mxu0 0.0
  %310 = vmatpush1.msra.mxu0 0.0
  %311 = vmatprep.subr.mxu0 0.0
  %312 = vmatpush1.msra.mxu0 0.0
  %313 = vmatprep.subr.mxu0 0.0
  %314 = vmatpush1.msra.mxu0 0.0
  %315 = vmatprep.subr.mxu0 0.0
  %316 = vmatpush1.msra.mxu0 0.0
  %317 = vmatprep.subr.mxu0 0.0
  %318 = vmatpush1.msra.mxu0 0.0
  %319 = vmatprep.subr.mxu0 0.0
  %320 = vmatpush1.msra.mxu0 0.0
  %321 = vmatprep.subr.mxu0 0.0
  %322 = vmatpush1.msra.mxu0 0.0
  %323 = vmatprep.subr.mxu0 0.0
  %324 = vmatpush1.msra.mxu0 0.0
  %325 = vmatprep.subr.mxu0 0.0
  %326 = vmatpush1.msra.mxu0 0.0
  %327 = vmatprep.subr.mxu0 0.0
  %328 = vmatpush1.msra.mxu0 0.0
  %329 = vmatprep.subr.mxu0 0.0
  %330 = vmatpush1.msra.mxu0 0.0
  %331 = vmatprep.subr.mxu0 0.0
  %332 = vmatpush1.msra.mxu0 0.0
  %333 = vmatprep.subr.mxu0 0.0
  %334 = vmatpush1.msra.mxu0 0.0
  %335 = vmatprep.mubr.f32.mxu0 0.0
  %336 = vmatmul.mubr.f32.gmra.mrb[0].mxu0 %v265
  %v337 = vpop.f32.mrb[0].mxu0
  %v338 = vadd.f32 %v241, %v337
  %v339 = vpop.f32.mrb[0].mxu0
  %340 = vdwg.mxu0
  %v341 = vtanh.pop %v338
  %v342 = vld [vmem:[%s1 + $0x1e] sm:$0x3f]
  %vm343 = vcmask 62464
  %v344 = vsel %vm343, %v342, -inf
  %345 = vmax.xlane.f32.xlu0 %v344
  %v346 = vpop.xlane.xlu0 %345
  %v347 = vsub.f32 %v342, %v346
  %v348 = vmul.f32 %v347, 1.442695
  %v349 = vpow.pop %v348
  %v350 = vsel %vm343, %v349, 0.0
  %351 = vadd.xlane.f32.xlu0 %v350
  %v352 = vpop.xlane.xlu0 %351
  %v353 = vrcp.pop %v352
  %v354 = vmul.f32 %v349, %v353
  %356 = vrot.lane.b32.xlu0 %v354, 16
  %v357 = vpop.permute.xlu0 %356
  %vm359 = vcmask 130048
  %v360 = vsel %vm359, %v341, %v357
  %v361 = vld [vmem:[%s1 + $0x5] sm:$0xff]
  %v362 = vld [vmem:[%s1 + $0xd] sm:$0xff]
  %v363 = vld [vmem:[%s1 + $0x15] sm:$0xff]
  %vm364 = vcmask 195584
  %v366 = vsel %vm364, %v360, 0
  %368 = vmatprep.subr.mxu0 0.0
  %369 = vmatpush1.msra.mxu0 %v361
  %370 = vmatprep.subr.mxu0 0.0
  %371 = vmatpush1.msra.mxu0 %v362
  %372 = vmatprep.subr.mxu0 0.0
  %373 = vmatpush1.msra.mxu0 %v363
  %374 = vmatprep.subr.mxu0 0.0
  %375 = vmatpush1.msra.mxu0 0.0
  %376 = vmatprep.subr.mxu0 0.0
  %377 = vmatpush1.msra.mxu0 0.0
  %378 = vmatprep.subr.mxu0 0.0
  %379 = vmatpush1.msra.mxu0 0.0
  %380 = vmatprep.subr.mxu0 0.0
  %381 = vmatpush1.msra.mxu0 0.0
  %382 = vmatprep.subr.mxu0 0.0
  %383 = vmatpush1.msra.mxu0 0.0
  %384 = vmatprep.subr.mxu0 0.0
  %385 = vmatpush1.msra.mxu0 0.0
  %386 = vmatprep.subr.mxu0 0.0
  %387 = vmatpush1.msra.mxu0 0.0
  %388 = vmatprep.subr.mxu0 0.0
  %389 = vmatpush1.msra.mxu0 0.0
  %390 = vmatprep.subr.mxu0 0.0
  %391 = vmatpush1.msra.mxu0 0.0
  %392 = vmatprep.subr.mxu0 0.0
  %393 = vmatpush1.msra.mxu0 0.0
  %394 = vmatprep.subr.mxu0 0.0
  %395 = vmatpush1.msra.mxu0 0.0
  %396 = vmatprep.subr.mxu0 0.0
  %397 = vmatpush1.msra.mxu0 0.0
  %398 = vmatprep.subr.mxu0 0.0
  %399 = vmatpush1.msra.mxu0 0.0
  %400 = vmatprep.subr.mxu0 0.0
  %401 = vmatpush1.msra.mxu0 0.0
  %402 = vmatprep.subr.mxu0 0.0
  %403 = vmatpush1.msra.mxu0 0.0
  %404 = vmatprep.subr.mxu0 0.0
  %405 = vmatpush1.msra.mxu0 0.0
  %406 = vmatprep.subr.mxu0 0.0
  %407 = vmatpush1.msra.mxu0 0.0
  %408 = vmatprep.subr.mxu0 0.0
  %409 = vmatpush1.msra.mxu0 0.0
  %410 = vmatprep.subr.mxu0 0.0
  %411 = vmatpush1.msra.mxu0 0.0
  %412 = vmatprep.subr.mxu0 0.0
  %413 = vmatpush1.msra.mxu0 0.0
  %414 = vmatprep.subr.mxu0 0.0
  %415 = vmatpush1.msra.mxu0 0.0
  %416 = vmatprep.subr.mxu0 0.0
  %417 = vmatpush1.msra.mxu0 0.0
  %418 = vmatprep.subr.mxu0 0.0
  %419 = vmatpush1.msra.mxu0 0.0
  %420 = vmatprep.subr.mxu0 0.0
  %421 = vmatpush1.msra.mxu0 0.0
  %422 = vmatprep.subr.mxu0 0.0
  %423 = vmatpush1.msra.mxu0 0.0
  %424 = vmatprep.subr.mxu0 0.0
  %425 = vmatpush1.msra.mxu0 0.0
  %426 = vmatprep.subr.mxu0 0.0
  %427 = vmatpush1.msra.mxu0 0.0
  %428 = vmatprep.subr.mxu0 0.0
  %429 = vmatpush1.msra.mxu0 0.0
  %430 = vmatprep.subr.mxu0 0.0
  %431 = vmatpush1.msra.mxu0 0.0
  %432 = vmatprep.mubr.f32.mxu0 0.0
  %433 = vmatmul.mubr.f32.gmra.mrb[0].mxu0 %v366
  %v434 = vpop.f32.mrb[0].mxu0
  %v435 = vadd.f32 0.0, %v434
  %v436 = vpop.f32.mrb[0].mxu0
  %437 = vdwg.mxu0
  %v438 = vld [vmem:[%s1 + $0x1d] sm:$0x1]
  %v439 = vlaneseq
  %v440 = vshrl.u32 %v439, 7
  %v441 = vsub.s32 0, %v440
  %v442 = vrot.slane %v438, %v441
  %v443 = vadd.f32 %v435, %v442
  %445 = vrot.lane.b32.xlu0 %v435, 124
  %v446 = vpop.permute.xlu0 %445
  %v448 = vsub.f32 %v341, %v446
  %449 = vrot.lane.b32.xlu0 %v435, 116
  %v450 = vpop.permute.xlu0 %449
  %v452 = vsub.f32 %v342, %v450
  %v453 = vmul.f32 %v448, %v448
  %vm454 = vcmask 128000
  %v455 = vsel %vm454, %v453, 0.0
  %456 = vadd.xlane.f32.xlu0 %v455
  %v457 = vpop.xlane.xlu0 %456
  %v458 = vmul.f32 %v457, 0.010416667
  %v459 = vmul.f32 %v354, %v354
  %v460 = vsel %vm343, %v459, 0.0
  %461 = vadd.xlane.f32.xlu0 %v460
  %v462 = vpop.xlane.xlu0 %461
  %v463 = vmul.f32 %v462, 0.0020833334
  %v464 = vmul.f32 %v443, 2.0
  %v471 = vsel %vm249, %v129, %v122
  %v472 = vsel %vm252, %v136, %v471
  %v473 = vsel %vm255, %v143, %v472
  %v474 = vsel %vm258, %v150, %v473
  %v475 = vsel %vm261, %v157, %v474
  %v477 = vmul.f32 %v464, %v475
  %v479 = vrot.slane %v477, 1
  %v480 = vrot.slane %v477, 2
  %v481 = vrot.slane %v477, 3
  %v482 = vrot.slane %v477, 4
  %v483 = vrot.slane %v477, 5
  %484 = vrot.lane.b32.xlu0 %v477, 8
  %v485 = vpop.permute.xlu0 %484
  %486 = vrot.lane.b32.xlu0 %v479, 8
  %v487 = vpop.permute.xlu0 %486
  %488 = vrot.lane.b32.xlu0 %v480, 8
  %v489 = vpop.permute.xlu0 %488
  %490 = vrot.lane.b32.xlu0 %v481, 8
  %v491 = vpop.permute.xlu0 %490
  %492 = vrot.lane.b32.xlu0 %v482, 8
  %v493 = vpop.permute.xlu0 %492
  %494 = vrot.lane.b32.xlu0 %v483, 8
  %v495 = vpop.permute.xlu0 %494
  %v502 = vsub.f32 %v122, %v485
  %v503 = vsub.f32 %v129, %v487
  %v504 = vsub.f32 %v136, %v489
  %v505 = vsub.f32 %v143, %v491
  %v506 = vsub.f32 %v150, %v493
  %v507 = vsub.f32 %v157, %v495
  %v508 = vmul.f32 %v443, %v443
  %509 = vrot.lane.b32.xlu0 %v475, 124
  %v510 = vpop.permute.xlu0 %509
  %v512 = vmul.f32 %v508, %v510
  %v514 = vrot.slane %v512, 1
  %v515 = vrot.slane %v512, 2
  %v516 = vrot.slane %v512, 3
  %v517 = vrot.slane %v512, 4
  %v518 = vrot.slane %v512, 5
  %519 = vrot.lane.b32.xlu0 %v512, 8
  %v520 = vpop.permute.xlu0 %519
  %521 = vrot.lane.b32.xlu0 %v514, 8
  %v522 = vpop.permute.xlu0 %521
  %523 = vrot.lane.b32.xlu0 %v515, 8
  %v524 = vpop.permute.xlu0 %523
  %525 = vrot.lane.b32.xlu0 %v516, 8
  %v526 = vpop.permute.xlu0 %525
  %527 = vrot.lane.b32.xlu0 %v517, 8
  %v528 = vpop.permute.xlu0 %527
  %529 = vrot.lane.b32.xlu0 %v518, 8
  %v530 = vpop.permute.xlu0 %529
  %v537 = vadd.f32 %v502, %v520
  %v538 = vadd.f32 %v503, %v522
  %v539 = vadd.f32 %v504, %v524
  %v540 = vadd.f32 %v505, %v526
  %v541 = vadd.f32 %v506, %v528
  %v542 = vadd.f32 %v507, %v530
  %v549 = vrot.slane %v538, 7
  %v550 = vsel %vm249, %v549, %v537
  %v551 = vrot.slane %v539, 6
  %v552 = vsel %vm252, %v551, %v550
  %v553 = vrot.slane %v540, 5
  %v554 = vsel %vm255, %v553, %v552
  %v555 = vrot.slane %v541, 4
  %v556 = vsel %vm258, %v555, %v554
  %v557 = vrot.slane %v542, 3
  %v558 = vsel %vm261, %v557, %v556
  %559 = vrot.lane.b32.xlu0 %v558, 120
  %v560 = vpop.permute.xlu0 %559
  %vm562 = vcmask 29696
  %v563 = vsel %vm562, %v560, 0.0
  %564 = vadd.xlane.f32.xlu0 %v563
  %v565 = vpop.xlane.xlu0 %564
  %v566 = vmul.f32 %v565, 0.5
  %v567 = vsel %vm562, %v510, 0.0
  %568 = vadd.xlane.f32.xlu0 %v567
  %v569 = vpop.xlane.xlu0 %568
  %v570 = vmul.f32 %v452, %v452
  %572 = vrot.lane.b32.xlu0 %v570, 120
  %v573 = vpop.permute.xlu0 %572
  %vm575 = vcmask 21504
  %v576 = vsel %vm575, %v573, 0.0
  %577 = vadd.xlane.f32.xlu0 %v576
  %v578 = vpop.xlane.xlu0 %577
  %v579 = vmul.f32 %v578, 0.3
  %v580 = vmul.f32 %v579, %v342
  %v581 = vand.u32 2147483647, %v452
  %583 = vrot.lane.b32.xlu0 %v581, 120
  %v584 = vpop.permute.xlu0 %583
  %v586 = vsel %vm575, %v584, 0.0
  %587 = vadd.xlane.f32.xlu0 %v586
  %v588 = vpop.xlane.xlu0 %587
  %v589 = vmul.f32 %v588, 0.055555556
  %591 = vrot.lane.b32.xlu0 %v580, 121
  %v592 = vpop.permute.xlu0 %591
  %595 = vrot.lane.b32.xlu0 %v342, 122
  %v596 = vpop.permute.xlu0 %595
  %vm598 = vcmask 7168
  %v599 = vsel %vm598, %v458, %v463
  %vm600 = vcmask 15360
  %v601 = vsel %vm600, %v599, %v566
  %vm602 = vcmask 23552
  %v603 = vsel %vm602, %v601, %v569
  %v604 = vsel %vm101, %v603, %v592
  %vm605 = vcmask 39936
  %v606 = vsel %vm605, %v604, %v596
  %vm607 = vcmask 48128
  %v608 = vsel %vm607, %v606, %v589
  %vm609 = vcmask 54272
  %v610 = vsel %vm609, %v608, 0.0
  %v611 = vrot.slane %v610, 4
  %v612 = vadd.f32 %v610, %v611
  %v613 = vrot.slane %v612, 2
  %v614 = vadd.f32 %v612, %v613
  %v615 = vrot.slane %v614, 1
  %v616 = vadd.f32 %v614, %v615
  %618 = vrot.lane.b32.xlu0 %v616, 127
  %v619 = vpop.permute.xlu0 %618
  %v621 = vadd.f32 %v616, %v619
  %v622 = vrcp.pop %v619
  %v623 = vmul.f32 %v616, %v622
  %625 = vrot.lane.b32.xlu0 %v623, 126
  %v626 = vpop.permute.xlu0 %625
  %v628 = vadd.f32 %v621, %v626
  %629 = vrot.lane.b32.xlu0 %v623, 124
  %v630 = vpop.permute.xlu0 %629
  %v632 = vadd.f32 %v628, %v630
  %633 = vrot.lane.b32.xlu0 %v616, 123
  %v634 = vpop.permute.xlu0 %633
  %v636 = vsel %vm598, %v632, %v634
  %v637 = vsel %vm600, %v636, 0.0
  %v639 = vrot.slane %v637, 2
  %vm641 = vcmask 1045504
  %v642 = vsel %vm641, %v341, %v639
  %vm643 = vcmask 129024
  %644 = vst.msk [vmem:[%s2] sm:$0x7f] %vm643, %v642
  // Predicated region
  $region10: #{synctwin_forward.1} parent=0 // pred_check
    _
  $region11: #{synctwin_forward.1} parent=0 // pred_check_branch
    %646 = sbr.rel (0) target = $region13
  $region12: #{synctwin_forward.1} parent=0 // pred_region
    _
  $region13: #{synctwin_forward.1} parent=0 // pred_fallthru
    _
  // Predicated region
  $region14: #{synctwin_forward.1} parent=0 // pred_check
    _
  $region15: #{synctwin_forward.1} parent=0 // pred_check_branch
    %648 = sbr.rel (0) target = $region17
  $region16: #{synctwin_forward.1} parent=0 // pred_region
    _
  $region17: #{synctwin_forward.1} parent=0 // pred_fallthru
    _

</llo_original>
